<compile_context>
chip_gen: v6e
topology: v6e:2x2x1
jax: 0.10.0
libtpu: 0.0.40
codegen_flags: <defaults>
</compile_context>

<pallas_src>
import functools

import jax
import jax.numpy as jnp
from jax.experimental import pallas as pl
from jax.experimental.pallas import tpu as pltpu


_H_RESIDENT_BYTES = 2 << 20  # keep full H resident in VMEM if <= 2 MiB (x2 buffers)


def _round_up(x, m):
    return (x + m - 1) // m * m


def _pick_tile(n):
    """Row/reduction tile: as large as possible up to 512, multiple of 128,
    but keep >= 2 row tiles so v7x's two TensorCores both get work."""
    n128 = _round_up(max(n, 1), 128)
    t = min(512, n128)
    if n128 // t < 2 and n128 >= 256:
        t = max(128, (n128 // 2) // 128 * 128)
    return t


# ----------------------------------------------------------------------------
# Kernel 1: H = X @ W   (row-tiled, bf16 operands, f32 accumulate, bf16 out)
# ----------------------------------------------------------------------------
def xw_kernel(x_ref, w_ref, h_ref):
    h_ref[...] = jnp.dot(
        x_ref[...], w_ref[...], preferred_element_type=jnp.float32
    ).astype(h_ref.dtype)


def xw_matmul(x_p, w_p, *, tm):
    n_pad, f_in_pad = x_p.shape
    f_out_pad = w_p.shape[1]
    grid = (n_pad // tm,)

    flops = 2 * n_pad * f_in_pad * f_out_pad
    bytes_accessed = x_p.size * 2 + w_p.size * 2 + n_pad * f_out_pad * 2

    return pl.pallas_call(
        xw_kernel,
        out_shape=jax.ShapeDtypeStruct((n_pad, f_out_pad), jnp.bfloat16),
        grid_spec=pltpu.PrefetchScalarGridSpec(
            num_scalar_prefetch=0,
            grid=grid,
            in_specs=[
                pl.BlockSpec((tm, f_in_pad), lambda i: (i, 0)),          # X row tile
                pl.BlockSpec((f_in_pad, f_out_pad), lambda i: (0, 0)),   # W resident
            ],
            out_specs=pl.BlockSpec((tm, f_out_pad), lambda i: (i, 0)),
        ),
        compiler_params=pltpu.CompilerParams(dimension_semantics=("parallel",)),
        cost_estimate=pl.CostEstimate(
            flops=flops, transcendentals=0, bytes_accessed=bytes_accessed),
    )(x_p, w_p)


# ----------------------------------------------------------------------------
# Kernel 2: out = A_norm @ H + b  (+ optional relu), row-tiled A reduction
# ----------------------------------------------------------------------------
def spmm_kernel(a_ref, h_ref, b_ref, o_ref, *scratch,
                apply_relu, h_resident, tk):
    k = pl.program_id(1)
    # f32 output: accumulate directly into the resident output block (no scratch).
    acc_ref = scratch[0] if scratch else o_ref

    @pl.when(k == 0)
    def _():
        acc_ref[...] = jnp.zeros_like(acc_ref)

    if h_resident:
        # Full H lives in VMEM (single DMA); slice the k-block out of it.
        h_blk = h_ref[pl.ds(pl.multiple_of(k * tk, tk), tk), :]
    else:
        h_blk = h_ref[...]

    acc_ref[...] += jnp.dot(a_ref[...], h_blk, preferred_element_type=jnp.float32)

    @pl.when(k == pl.num_programs(1) - 1)
    def _():
        out = acc_ref[...] + b_ref[...]
        if apply_relu:
            out = jnp.maximum(out, 0.0)
        o_ref[...] = out.astype(o_ref.dtype)


def a_spmm(a_p, h_p, b_p, *, tm, tk, apply_relu, out_dtype):
    n_pad = a_p.shape[0]
    f_out_pad = h_p.shape[1]
    grid = (n_pad // tm, n_pad // tk)

    h_bytes = h_p.size * 2
    h_resident = h_bytes <= _H_RESIDENT_BYTES
    if h_resident:
        h_spec = pl.BlockSpec((n_pad, f_out_pad), lambda i, k: (0, 0))   # DMA'd once
        h_traffic = h_bytes
    else:
        h_spec = pl.BlockSpec((tk, f_out_pad), lambda i, k: (k, 0))
        h_traffic = h_bytes * grid[0]                                    # per row tile

    # Keep a separate f32 accumulator only when the stored output is bf16 (h1).
    use_scratch = jnp.dtype(out_dtype) != jnp.dtype(jnp.float32)
    scratch_shapes = ([pltpu.VMEM((tm, f_out_pad), jnp.float32)]
                      if use_scratch else [])

    flops = 2 * n_pad * n_pad * f_out_pad
    bytes_accessed = (a_p.size * 2 + h_traffic + b_p.size * 4
                      + n_pad * f_out_pad * jnp.dtype(out_dtype).itemsize)

    kernel = functools.partial(
        spmm_kernel, apply_relu=apply_relu, h_resident=h_resident, tk=tk)

    return pl.pallas_call(
        kernel,
        out_shape=jax.ShapeDtypeStruct((n_pad, f_out_pad), out_dtype),
        grid_spec=pltpu.PrefetchScalarGridSpec(
            num_scalar_prefetch=0,
            grid=grid,
            in_specs=[
                pl.BlockSpec((tm, tk), lambda i, k: (i, k)),     # A tile
                h_spec,                                          # H (resident or k-tiled)
                pl.BlockSpec((1, f_out_pad), lambda i, k: (0, 0)),  # bias resident
            ],
            out_specs=pl.BlockSpec((tm, f_out_pad), lambda i, k: (i, 0)),
            scratch_shapes=scratch_shapes,
        ),
        compiler_params=pltpu.CompilerParams(
            dimension_semantics=("parallel", "arbitrary")),
        cost_estimate=pl.CostEstimate(
            flops=flops, transcendentals=0, bytes_accessed=bytes_accessed),
    )(a_p, h_p, b_p)


# ----------------------------------------------------------------------------
# GraphConv layer & 2-layer GCN forward (operates in padded space)
# ----------------------------------------------------------------------------
def gcn_layer(a_p, x_p, w, b, *, tm, tk, apply_relu, out_dtype):
    """a_p: (n_pad, n_pad) bf16, x_p: (n_pad, f_in_pad) bf16 -> (n_pad, f_out_pad)."""
    f_in, f_out = w.shape
    f_in_pad = x_p.shape[1]
    f_out_pad = _round_up(f_out, 128)

    w_p = jnp.pad(w, ((0, f_in_pad - f_in), (0, f_out_pad - f_out))).astype(jnp.bfloat16)
    b_p = jnp.pad(b, ((0, 0), (0, f_out_pad - f_out))).astype(jnp.float32)

    h = xw_matmul(x_p, w_p, tm=tm)                               # X @ W, bf16
    return a_spmm(a_p, h, b_p, tm=tm, tk=tk,
                  apply_relu=apply_relu, out_dtype=out_dtype)    # A @ H + b


def gcn_forward(a_norm, x, w1, b1, w2, b2):
    n = a_norm.shape[0]
    f_in = x.shape[1]
    out_size = w2.shape[1]

    tm = _pick_tile(n)
    tk = tm
    n_pad = _round_up(n, tm)
    f_in_pad = _round_up(f_in, 128)

    # Pad & cast A and X exactly once; A is reused by both layers.
    a_p = jnp.pad(a_norm, ((0, n_pad - n), (0, n_pad - n))).astype(jnp.bfloat16)
    x_p = jnp.pad(x, ((0, n_pad - n), (0, f_in_pad - f_in))).astype(jnp.bfloat16)

    # Layer 1: stays padded, emitted directly as bf16 (feeds layer 2's XW matmul).
    h1_p = gcn_layer(a_p, x_p, w1, b1, tm=tm, tk=tk,
                     apply_relu=True, out_dtype=jnp.bfloat16)
    # TODO(synk): dropout(p=0.5) here in train mode; eval-mode identity.
    out_p = gcn_layer(a_p, h1_p, w2, b2, tm=tm, tk=tk,
                      apply_relu=False, out_dtype=jnp.float32)
    return out_p[:n, :out_size]


# ----------------------------------------------------------------------------
# Graph construction + pure-JAX reference (same bf16/f32 numerics as the kernels)
# ----------------------------------------------------------------------------
def build_normalized_adjacency(key, n):
    """Random undirected graph -> symmetric D^{-1/2} A D^{-1/2} (DGL norm='both')."""
    upper = jax.random.bernoulli(key, p=0.15, shape=(n, n)).astype(jnp.float32)
    upper = jnp.triu(upper, k=1)
    adj = upper + upper.T                            # symmetric, no self loops
    deg = adj.sum(axis=1)
    d_inv_sqrt = jnp.where(deg > 0, deg ** -0.5, 0.0)
    return adj * d_inv_sqrt[:, None] * d_inv_sqrt[None, :]


def ref_forward(a, x, w1, b1, w2, b2):
    bf16, f32 = jnp.bfloat16, jnp.float32
    a_b = a.astype(bf16)
    h = jnp.dot(x.astype(bf16), w1.astype(bf16), preferred_element_type=f32).astype(bf16)
    h = jnp.maximum(jnp.dot(a_b, h, preferred_element_type=f32) + b1, 0.0).astype(bf16)
    h2 = jnp.dot(h, w2.astype(bf16), preferred_element_type=f32).astype(bf16)
    return jnp.dot(a_b, h2, preferred_element_type=f32) + b2


if __name__ == "__main__":
    key = jax.random.PRNGKey(0)
    k_adj, k_x, k_w1, k_w2 = jax.random.split(key, 4)

    # Small shapes consistent with the module: N nodes, in -> hid -> out.
    N, in_size, hid_size, out_size = 64, 32, 32, 8

    a_norm = build_normalized_adjacency(k_adj, N)                       # (N, N)
    x = jax.random.normal(k_x, (N, in_size), dtype=jnp.float32)         # (N, in)

    # Deterministic Glorot-style parameter init (GraphConv weight + bias).
    lim1 = (6.0 / (in_size + hid_size)) ** 0.5
    w1 = jax.random.uniform(k_w1, (in_size, hid_size), jnp.float32, -lim1, lim1)
    b1 = jnp.zeros((1, hid_size), jnp.float32)
    lim2 = (6.0 / (hid_size + out_size)) ** 0.5
    w2 = jax.random.uniform(k_w2, (hid_size, out_size), jnp.float32, -lim2, lim2)
    b2 = jnp.zeros((1, out_size), jnp.float32)

    out = gcn_forward(a_norm, x, w1, b1, w2, b2)
    jax.block_until_ready(out)

    o_ref = ref_forward(a_norm, x, w1, b1, w2, b2)
    assert out.shape == (N, out_size)
    assert jnp.allclose(out, o_ref, atol=1e-2, rtol=1e-2)

    print("KERNEL_OK")
</pallas_src>

<mosaic_0001>
module attributes {stable_mosaic.version = 11 : i64} {
  func.func @xw_kernel(%arg0: i32, %arg1: memref<128x128xbf16, #tpu.memory_space<vmem>>, %arg2: memref<128x128xbf16, #tpu.memory_space<vmem>>, %arg3: memref<128x128xbf16, #tpu.memory_space<vmem>>) attributes {dimension_semantics = [#tpu.dimension_semantics<parallel>], iteration_bounds = array<i64: 1>, scalar_prefetch = 0 : i64, scratch_operands = 0 : i64, tpu.core_type = #tpu.core_type<tc>, window_params = [{transform_indices = @transform_0, window_bounds = array<i64: 128, 128>}, {pipeline_mode = #tpu.pipeline_mode<synchronous>, transform_indices = @transform_1, window_bounds = array<i64: 128, 128>}, {transform_indices = @transform_2, window_bounds = array<i64: 128, 128>}]} {
    %c0 = arith.constant 0 : index
    %c0_0 = arith.constant 0 : index
    %0 = vector.load %arg1[%c0, %c0_0] : memref<128x128xbf16, #tpu.memory_space<vmem>>, vector<128x128xbf16>
    %c0_1 = arith.constant 0 : index
    %c0_2 = arith.constant 0 : index
    %1 = vector.load %arg2[%c0_1, %c0_2] : memref<128x128xbf16, #tpu.memory_space<vmem>>, vector<128x128xbf16>
    %cst = arith.constant dense<0.000000e+00> : vector<128x128xf32>
    %2 = tpu.matmul %0, %1, %cst {dimension_numbers = #tpu.dot_dimension_numbers<[1], [0], [0], [1], [0, 0, 1, 1], [], []>} : vector<128x128xbf16>, vector<128x128xbf16>, vector<128x128xf32> -> vector<128x128xf32>
    %3 = arith.truncf %2 : vector<128x128xf32> to vector<128x128xbf16>
    %c0_3 = arith.constant 0 : index
    %c0_4 = arith.constant 0 : index
    %4 = vector.load %arg3[%c0_3, %c0_4] : memref<128x128xbf16, #tpu.memory_space<vmem>>, vector<128x128xbf16>
    tpu.vector_store %arg3[%c0_3, %c0_4], %3 {strides = array<i32>} : memref<128x128xbf16, #tpu.memory_space<vmem>>, vector<128x128xbf16>,
    return
  }
  func.func @transform_0(%arg0: i32) -> (i32, i32) {
    %c0_i32 = arith.constant 0 : i32
    %c0_i32_0 = arith.constant 0 : i32
    return %arg0, %c0_i32 : i32, i32
  }
  func.func @transform_1(%arg0: i32) -> (i32, i32) {
    %c0_i32 = arith.constant 0 : i32
    %c0_i32_0 = arith.constant 0 : i32
    %c0_i32_1 = arith.constant 0 : i32
    return %c0_i32, %c0_i32_0 : i32, i32
  }
  func.func @transform_2(%arg0: i32) -> (i32, i32) {
    %c0_i32 = arith.constant 0 : i32
    %c0_i32_0 = arith.constant 0 : i32
    return %arg0, %c0_i32 : i32, i32
  }
}

</mosaic_0001>

<llo_original>
// kernel: tpu_custom_call.1
$region0: #{tpu_custom_call.1}
  #allocation0 [shape = 'u32[]', space=smem, size = 0x4, offset = 0x4, fixed_abs, tag = 'smem constant byte address 0x4 - core index']
  #allocation1 [shape = 'u32[144,128]{1,0:T(1,128)}', space=vmem, size = 0x12000, scoped, tag = 'internal scratch']
  %s0 = inlined_call_operand.hbm [shape: bf16[128,128], index: 0, kind: input, shape index: {}]
  %s1 = inlined_call_operand.hbm [shape: bf16[128,128], index: 1, kind: input, shape index: {}]
  %s2 = inlined_call_operand.hbm [shape: bf16[128,128], index: 2, kind: output, shape index: {}]
  %s3 = sld [smem:[#allocation0]]
  $region26: #{tpu_custom_call.1} parent=0
    _
  %s5 = ssub.s32 1, %s3
  %s6 = scalar_select 0, %s5, %s3
  $region1: #{tpu_custom_call.1} parent=0
    #allocation2 [shape = 'u8[32768]{0}', space=vmem, size = 0x8000, scoped, tag = 'input window, operand 0, single buffered']
    #allocation3 [shape = 's32[1]{0}', space=sflag, size = 0x4, scoped, tag = 'scoped memory for tpu_custom_call.1']
    #allocation4 [shape = 's32[1]{0}', space=sflag, size = 0x4, scoped, tag = 'scoped memory for tpu_custom_call.1']
    #allocation5 [shape = 'u8[32768]{0}', space=vmem, size = 0x8000, scoped, tag = 'input window, operand 1, single buffered']
    #allocation6 [shape = 's32[1]{0}', space=sflag, size = 0x4, scoped, tag = 'scoped memory for tpu_custom_call.1']
    #allocation7 [shape = 'u8[32768]{0}', space=vmem, size = 0x8000, scoped, tag = 'output window, operand 0, single buffered']
    %7 = vsyncpa [#allocation3], 0
    %8 = vsyncpa [#allocation6], 0
    %9 = vsyncpa [#allocation4], 0
    // Predicated region
    $region2: #{tpu_custom_call.1} parent=1 // pred_check
      _
    $region3: #{tpu_custom_call.1} parent=1 // pred_check_branch
      %11 = sbr.rel (0) target = $region5
    $region4: #{tpu_custom_call.1} parent=1 // pred_region
      %s13 = ssub.s32 1024, 1024
      %14 = vsyncadd [#allocation3], %s13
      %s15 = sshll.u32 [#allocation2], 4
      %s16 = int_to_ptr.vmem [resolvable:$true] %s15
      %21 = dma.hbm_to_vmem [thread:$0]  %s0, 1024, %s16, [#allocation3], 64, 64, 4
    $region5: #{tpu_custom_call.1} parent=1 // pred_fallthru
      _
    // Predicated region
    $region6: #{tpu_custom_call.1} parent=1 // pred_check
      _
    $region7: #{tpu_custom_call.1} parent=1 // pred_check_branch
      %23 = sbr.rel (0) target = $region9
    $region8: #{tpu_custom_call.1} parent=1 // pred_region
      %s25 = ssub.s32 1024, 1024
      %26 = vsyncadd [#allocation6], %s25
      %s27 = sshll.u32 [#allocation5], 4
      %s28 = int_to_ptr.vmem [resolvable:$true] %s27
      %33 = dma.hbm_to_vmem [thread:$0]  %s1, 1024, %s28, [#allocation6], 64, 64, 4
    $region9: #{tpu_custom_call.1} parent=1 // pred_fallthru
      _
    // Predicated region
    $region10: #{tpu_custom_call.1} parent=1 // pred_check
      _
    $region11: #{tpu_custom_call.1} parent=1 // pred_check_branch
      %35 = sbr.rel (0) target = $region13
    $region12: #{tpu_custom_call.1} parent=1 // pred_region
      %36 = dma.done [#allocation3], 1024
    $region13: #{tpu_custom_call.1} parent=1 // pred_fallthru
      _
    // Predicated region
    $region14: #{tpu_custom_call.1} parent=1 // pred_check
      _
    $region15: #{tpu_custom_call.1} parent=1 // pred_check_branch
      %38 = sbr.rel (0) target = $region17
    $region16: #{tpu_custom_call.1} parent=1 // pred_region
      %39 = dma.done [#allocation6], 1024
    $region17: #{tpu_custom_call.1} parent=1 // pred_fallthru
      _
    %v41 = vld [vmem:[#allocation2] sm:$0xf]
    %v42 = vld [vmem:[#allocation2 + $0x4] sm:$0xf]
    %v43 = vld [vmem:[#allocation2 + $0x8] sm:$0xf]
    %v44 = vld [vmem:[#allocation2 + $0xc] sm:$0xf]
    %v45 = vld [vmem:[#allocation2 + $0x10] sm:$0xf]
    %v46 = vld [vmem:[#allocation2 + $0x14] sm:$0xf]
    %v47 = vld [vmem:[#allocation2 + $0x18] sm:$0xf]
    %v48 = vld [vmem:[#allocation2 + $0x1c] sm:$0xf]
    %v49 = vld [vmem:[#allocation2 + $0x20] sm:$0xf]
    %v50 = vld [vmem:[#allocation2 + $0x24] sm:$0xf]
    %v51 = vld [vmem:[#allocation2 + $0x28] sm:$0xf]
    %v52 = vld [vmem:[#allocation2 + $0x2c] sm:$0xf]
    %v53 = vld [vmem:[#allocation2 + $0x30] sm:$0xf]
    %v54 = vld [vmem:[#allocation2 + $0x34] sm:$0xf]
    %v55 = vld [vmem:[#allocation2 + $0x38] sm:$0xf]
    %v56 = vld [vmem:[#allocation2 + $0x3c] sm:$0xf]
    %v57 = vld [vmem:[#allocation5] sm:$0xf]
    %v58 = vld [vmem:[#allocation5 + $0x4] sm:$0xf]
    %v59 = vld [vmem:[#allocation5 + $0x8] sm:$0xf]
    %v60 = vld [vmem:[#allocation5 + $0xc] sm:$0xf]
    %v61 = vld [vmem:[#allocation5 + $0x10] sm:$0xf]
    %v62 = vld [vmem:[#allocation5 + $0x14] sm:$0xf]
    %v63 = vld [vmem:[#allocation5 + $0x18] sm:$0xf]
    %v64 = vld [vmem:[#allocation5 + $0x1c] sm:$0xf]
    %v65 = vld [vmem:[#allocation5 + $0x20] sm:$0xf]
    %v66 = vld [vmem:[#allocation5 + $0x24] sm:$0xf]
    %v67 = vld [vmem:[#allocation5 + $0x28] sm:$0xf]
    %v68 = vld [vmem:[#allocation5 + $0x2c] sm:$0xf]
    %v69 = vld [vmem:[#allocation5 + $0x30] sm:$0xf]
    %v70 = vld [vmem:[#allocation5 + $0x34] sm:$0xf]
    %v71 = vld [vmem:[#allocation5 + $0x38] sm:$0xf]
    %v72 = vld [vmem:[#allocation5 + $0x3c] sm:$0xf]
    %v89 = vunpack.c.l.b16 %v41
    %v90 = vunpack.c.l.b16 %v42
    %v91 = vunpack.c.l.b16 %v43
    %v92 = vunpack.c.l.b16 %v44
    %v93 = vunpack.c.l.b16 %v45
    %v94 = vunpack.c.l.b16 %v46
    %v95 = vunpack.c.l.b16 %v47
    %v96 = vunpack.c.l.b16 %v48
    %v97 = vunpack.c.l.b16 %v49
    %v98 = vunpack.c.l.b16 %v50
    %v99 = vunpack.c.l.b16 %v51
    %v100 = vunpack.c.l.b16 %v52
    %v101 = vunpack.c.l.b16 %v53
    %v102 = vunpack.c.l.b16 %v54
    %v103 = vunpack.c.l.b16 %v55
    %v104 = vunpack.c.l.b16 %v56
    %v105 = vpack.c.b16 %v90, %v89
    %v106 = vpack.c.b16 %v92, %v91
    %v107 = vpack.c.b16 %v94, %v93
    %v108 = vpack.c.b16 %v96, %v95
    %v109 = vpack.c.b16 %v98, %v97
    %v110 = vpack.c.b16 %v100, %v99
    %v111 = vpack.c.b16 %v102, %v101
    %v112 = vpack.c.b16 %v104, %v103
    %v137 = vunpack.c.l.b16 %v57
    %v138 = vunpack.c.l.b16 %v58
    %v139 = vunpack.c.l.b16 %v59
    %v140 = vunpack.c.l.b16 %v60
    %v141 = vunpack.c.l.b16 %v61
    %v142 = vunpack.c.l.b16 %v62
    %v143 = vunpack.c.l.b16 %v63
    %v144 = vunpack.c.l.b16 %v64
    %v145 = vunpack.c.l.b16 %v65
    %v146 = vunpack.c.l.b16 %v66
    %v147 = vunpack.c.l.b16 %v67
    %v148 = vunpack.c.l.b16 %v68
    %v149 = vunpack.c.l.b16 %v69
    %v150 = vunpack.c.l.b16 %v70
    %v151 = vunpack.c.l.b16 %v71
    %v152 = vunpack.c.l.b16 %v72
    %v153 = vpack.c.b16 %v138, %v137
    %v154 = vpack.c.b16 %v140, %v139
    %v155 = vpack.c.b16 %v142, %v141
    %v156 = vpack.c.b16 %v144, %v143
    %v157 = vpack.c.b16 %v146, %v145
    %v158 = vpack.c.b16 %v148, %v147
    %v159 = vpack.c.b16 %v150, %v149
    %v160 = vpack.c.b16 %v152, %v151
    %169 = vmatprep.subr.bf16.mxu0 0
    %170 = vmatpush1.bf16.msra.mxu0 %v160
    %171 = vmatprep.subr.bf16.mxu0 0
    %172 = vmatpush1.bf16.msra.mxu0 %v159
    %173 = vmatprep.subr.bf16.mxu0 0
    %174 = vmatpush1.bf16.msra.mxu0 %v158
    %175 = vmatprep.subr.bf16.mxu0 0
    %176 = vmatpush1.bf16.msra.mxu0 %v157
    %177 = vmatprep.subr.bf16.mxu0 0
    %178 = vmatpush1.bf16.msra.mxu0 %v156
    %179 = vmatprep.subr.bf16.mxu0 0
    %180 = vmatpush1.bf16.msra.mxu0 %v155
    %181 = vmatprep.subr.bf16.mxu0 0
    %182 = vmatpush1.bf16.msra.mxu0 %v154
    %183 = vmatprep.subr.bf16.mxu0 0
    %184 = vmatpush1.bf16.msra.mxu0 %v153
    %185 = vmatprep.subr.bf16.mxu0 0
    %186 = vmatpush2.bf16.msra.mxu0 0
    %187 = vmatprep.subr.bf16.mxu0 0
    %188 = vmatpush2.bf16.msra.mxu0 0
    %189 = vmatprep.subr.bf16.mxu0 0
    %190 = vmatpush2.bf16.msra.mxu0 0
    %191 = vmatprep.subr.bf16.mxu0 0
    %192 = vmatpush2.bf16.msra.mxu0 0
    %193 = vmatprep.subr.bf16.mxu0 0
    %194 = vmatpush2.bf16.msra.mxu0 0
    %195 = vmatprep.subr.bf16.mxu0 0
    %196 = vmatpush2.bf16.msra.mxu0 0
    %197 = vmatprep.subr.bf16.mxu0 0
    %198 = vmatpush2.bf16.msra.mxu0 0
    %199 = vmatprep.subr.bf16.mxu0 0
    %200 = vmatpush2.bf16.msra.mxu0 0
    %201 = vmatprep.mubr.bf16.mxu0 0
    %202 = vmatmul.mubr.bf16.gmra.mxu0 %v105
    %v203 = vpop.f32.mrf.mxu0
    %v204 = vadd.f32 0.0, %v203
    %v205 = vpop.f32.mrf.mxu0
    %v206 = vpop.f32.mrf.mxu0
    %v207 = vadd.f32 0.0, %v206
    %v208 = vpop.f32.mrf.mxu0
    %209 = vmatprep.mubr.bf16.mxu0 0
    %210 = vmatmul.mubr.bf16.gmra.mxu0 %v106
    %v211 = vpop.f32.mrf.mxu0
    %v212 = vadd.f32 0.0, %v211
    %v213 = vpop.f32.mrf.mxu0
    %v214 = vpop.f32.mrf.mxu0
    %v215 = vadd.f32 0.0, %v214
    %v216 = vpop.f32.mrf.mxu0
    %217 = vmatprep.mubr.bf16.mxu0 0
    %218 = vmatmul.mubr.bf16.gmra.mxu0 %v107
    %v219 = vpop.f32.mrf.mxu0
    %v220 = vadd.f32 0.0, %v219
    %v221 = vpop.f32.mrf.mxu0
    %v222 = vpop.f32.mrf.mxu0
    %v223 = vadd.f32 0.0, %v222
    %v224 = vpop.f32.mrf.mxu0
    %225 = vmatprep.mubr.bf16.mxu0 0
    %226 = vmatmul.mubr.bf16.gmra.mxu0 %v108
    %v227 = vpop.f32.mrf.mxu0
    %v228 = vadd.f32 0.0, %v227
    %v229 = vpop.f32.mrf.mxu0
    %v230 = vpop.f32.mrf.mxu0
    %v231 = vadd.f32 0.0, %v230
    %v232 = vpop.f32.mrf.mxu0
    %233 = vmatprep.mubr.bf16.mxu0 0
    %234 = vmatmul.mubr.bf16.gmra.mxu0 %v109
    %v235 = vpop.f32.mrf.mxu0
    %v236 = vadd.f32 0.0, %v235
    %v237 = vpop.f32.mrf.mxu0
    %v238 = vpop.f32.mrf.mxu0
    %v239 = vadd.f32 0.0, %v238
    %v240 = vpop.f32.mrf.mxu0
    %241 = vmatprep.mubr.bf16.mxu0 0
    %242 = vmatmul.mubr.bf16.gmra.mxu0 %v110
    %v243 = vpop.f32.mrf.mxu0
    %v244 = vadd.f32 0.0, %v243
    %v245 = vpop.f32.mrf.mxu0
    %v246 = vpop.f32.mrf.mxu0
    %v247 = vadd.f32 0.0, %v246
    %v248 = vpop.f32.mrf.mxu0
    %249 = vmatprep.mubr.bf16.mxu0 0
    %250 = vmatmul.mubr.bf16.gmra.mxu0 %v111
    %v251 = vpop.f32.mrf.mxu0
    %v252 = vadd.f32 0.0, %v251
    %v253 = vpop.f32.mrf.mxu0
    %v254 = vpop.f32.mrf.mxu0
    %v255 = vadd.f32 0.0, %v254
    %v256 = vpop.f32.mrf.mxu0
    %257 = vmatprep.mubr.bf16.mxu0 0
    %258 = vmatmul.mubr.bf16.gmra.mxu0 %v112
    %v259 = vpop.f32.mrf.mxu0
    %v260 = vadd.f32 0.0, %v259
    %v261 = vpop.f32.mrf.mxu0
    %v262 = vpop.f32.mrf.mxu0
    %v263 = vadd.f32 0.0, %v262
    %v264 = vpop.f32.mrf.mxu0
    %265 = vdwg.mxu0
    %v266 = vpack.c.bf16 %v207, %v204
    %v267 = vpack.c.bf16 %v215, %v212
    %v268 = vpack.c.bf16 %v223, %v220
    %v269 = vpack.c.bf16 %v231, %v228
    %v270 = vpack.c.bf16 %v239, %v236
    %v271 = vpack.c.bf16 %v247, %v244
    %v272 = vpack.c.bf16 %v255, %v252
    %v273 = vpack.c.bf16 %v263, %v260
    %v282 = vunpack.c.l.b16 %v266
    %v283 = vunpack.c.h.b16 %v266
    %v284 = vunpack.c.l.b16 %v267
    %v285 = vunpack.c.h.b16 %v267
    %v286 = vunpack.c.l.b16 %v268
    %v287 = vunpack.c.h.b16 %v268
    %v288 = vunpack.c.l.b16 %v269
    %v289 = vunpack.c.h.b16 %v269
    %v290 = vunpack.c.l.b16 %v270
    %v291 = vunpack.c.h.b16 %v270
    %v292 = vunpack.c.l.b16 %v271
    %v293 = vunpack.c.h.b16 %v271
    %v294 = vunpack.c.l.b16 %v272
    %v295 = vunpack.c.h.b16 %v272
    %v296 = vunpack.c.l.b16 %v273
    %v297 = vunpack.c.h.b16 %v273
    %v298 = vpack.c.b16 %v282, %v282
    %v299 = vpack.c.b16 %v283, %v283
    %v300 = vpack.c.b16 %v284, %v284
    %v301 = vpack.c.b16 %v285, %v285
    %v302 = vpack.c.b16 %v286, %v286
    %v303 = vpack.c.b16 %v287, %v287
    %v304 = vpack.c.b16 %v288, %v288
    %v305 = vpack.c.b16 %v289, %v289
    %v306 = vpack.c.b16 %v290, %v290
    %v307 = vpack.c.b16 %v291, %v291
    %v308 = vpack.c.b16 %v292, %v292
    %v309 = vpack.c.b16 %v293, %v293
    %v310 = vpack.c.b16 %v294, %v294
    %v311 = vpack.c.b16 %v295, %v295
    %v312 = vpack.c.b16 %v296, %v296
    %v313 = vpack.c.b16 %v297, %v297
    %330 = vst [vmem:[#allocation7] sm:$0xf] %v298
    %331 = vst [vmem:[#allocation7 + $0x4] sm:$0xf] %v299
    %332 = vst [vmem:[#allocation7 + $0x8] sm:$0xf] %v300
    %333 = vst [vmem:[#allocation7 + $0xc] sm:$0xf] %v301
    %334 = vst [vmem:[#allocation7 + $0x10] sm:$0xf] %v302
    %335 = vst [vmem:[#allocation7 + $0x14] sm:$0xf] %v303
    %336 = vst [vmem:[#allocation7 + $0x18] sm:$0xf] %v304
    %337 = vst [vmem:[#allocation7 + $0x1c] sm:$0xf] %v305
    %338 = vst [vmem:[#allocation7 + $0x20] sm:$0xf] %v306
    %339 = vst [vmem:[#allocation7 + $0x24] sm:$0xf] %v307
    %340 = vst [vmem:[#allocation7 + $0x28] sm:$0xf] %v308
    %341 = vst [vmem:[#allocation7 + $0x2c] sm:$0xf] %v309
    %342 = vst [vmem:[#allocation7 + $0x30] sm:$0xf] %v310
    %343 = vst [vmem:[#allocation7 + $0x34] sm:$0xf] %v311
    %344 = vst [vmem:[#allocation7 + $0x38] sm:$0xf] %v312
    %345 = vst [vmem:[#allocation7 + $0x3c] sm:$0xf] %v313
    // Predicated region
    $region18: #{tpu_custom_call.1} parent=1 // pred_check
      _
    $region19: #{tpu_custom_call.1} parent=1 // pred_check_branch
      %347 = sbr.rel (0) target = $region21
    $region20: #{tpu_custom_call.1} parent=1 // pred_region
      %s349 = ssub.s32 1024, 1024
      %350 = vsyncadd [#allocation4], %s349
      %s351 = sshll.u32 [#allocation7], 4
      %s352 = int_to_ptr.vmem [resolvable:$true] %s351
      %357 = dma.vmem_to_hbm [thread:$0]  %s352, 1024, %s2, [#allocation4], 64, 64, 4
    $region21: #{tpu_custom_call.1} parent=1 // pred_fallthru
      _
    // Predicated region
    $region22: #{tpu_custom_call.1} parent=1 // pred_check
      _
    $region23: #{tpu_custom_call.1} parent=1 // pred_check_branch
      %359 = sbr.rel (0) target = $region25
    $region24: #{tpu_custom_call.1} parent=1 // pred_region
      %360 = dma.done [#allocation4], 1024
    $region25: #{tpu_custom_call.1} parent=1 // pred_fallthru
      _
    %361 = vsyncpa [#allocation3], 1
    %362 = vsyncpa [#allocation6], 1
    %363 = vsyncpa [#allocation4], 1

</llo_original>
